<compile_context>
chip_gen: v6e
topology: v6e:2x2x1
jax: 0.10.0
libtpu: 0.0.40
codegen_flags: <defaults>
</compile_context>

<pallas_src>
import functools

import jax
import jax.numpy as jnp
from jax import lax
from jax.experimental import pallas as pl
from jax.experimental.pallas import tpu as pltpu

EPS = 1e-5
LANE = 128
SUBLANE = 8


def _round_up(x, m):
    return ((x + m - 1) // m) * m


def _round_down(x, m):
    return (x // m) * m


def _vmem_budget_and_limit():
    """(per-grid-step tile budget, vmem_limit_bytes) from physical VMEM."""
    try:
        cap = int(pltpu.get_tpu_info().vmem_capacity_bytes)
    except Exception:
        cap = 64 * 1024 * 1024  # conservative default (v7x per-TC VMEM)
    budget = int(cap * 0.40)                       # dbl-buffered in+out+temps
    limit = min(int(cap * 0.75), 100 * 1024 * 1024)
    return budget, limit


def _bf16_native_ok():
    """bf16 VALU lanes exist on v6e/v7x; keep the f32 path on <= v5."""
    try:
        kind = jax.devices()[0].device_kind.lower()
    except Exception:
        return False
    return not any(v in kind for v in ("v2", "v3", "v4", "v5"))


def _largest_dividing_tile(total, unit, cap):
    """Largest multiple of `unit` dividing `total` and <= cap (floor `unit`)."""
    best = unit
    t = unit
    top = min(total, max(cap, unit))
    while t <= top:
        if total % t == 0:
            best = t
        t += unit
    return best


# --------------- single-call path: whole batch resident per channel tile ----

def _bn_kernel(x_ref, gamma_ref, o_ref, *, inv_n, eps, native_ew):
    f32 = jnp.float32
    # Batch statistics in f32 (VPU reduction; hidden under the tile DMA).
    mean = jnp.sum(x_ref[...].astype(f32), axis=0, keepdims=True) * inv_n
    # Two-pass variance: x stays resident in VMEM; extra subtract is free and
    # avoids catastrophic cancellation of E[x^2] - mean^2.
    d = x_ref[...].astype(f32) - mean
    var = jnp.sum(d * d, axis=0, keepdims=True) * inv_n
    scale = lax.rsqrt(var + eps) * gamma_ref[...]
    shift = -mean * scale                       # beta is frozen at 0
    if native_ew:
        # bf16-native streaming pass (v6e/v7x): re-read x_ref instead of
        # keeping an f32 copy live -> half the vreg/VMEM pressure.
        o_ref[...] = (x_ref[...] * scale.astype(o_ref.dtype)
                      + shift.astype(o_ref.dtype))
    else:
        o_ref[...] = (x_ref[...].astype(f32) * scale + shift).astype(o_ref.dtype)


# --------------- large-N path: batch-tiled two-pass (two pallas_calls) ------

def _bn_stats_kernel(x_ref, gamma_ref, scale_ref, shift_ref, sum_ref, ssq_ref,
                     *, inv_n, eps):
    i = pl.program_id(1)  # batch-tile (reduction) axis, innermost

    @pl.when(i == 0)
    def _():
        sum_ref[...] = jnp.zeros_like(sum_ref)
        ssq_ref[...] = jnp.zeros_like(ssq_ref)

    x = x_ref[...].astype(jnp.float32)
    sum_ref[...] += jnp.sum(x, axis=0, keepdims=True)
    ssq_ref[...] += jnp.sum(x * x, axis=0, keepdims=True)

    @pl.when(i == pl.num_programs(1) - 1)
    def _():
        mean = sum_ref[...] * inv_n
        var = jnp.maximum(ssq_ref[...] * inv_n - mean * mean, 0.0)
        scale = lax.rsqrt(var + eps) * gamma_ref[...]
        scale_ref[...] = scale
        shift_ref[...] = -mean * scale          # beta is frozen at 0


def _bn_apply_kernel(x_ref, scale_ref, shift_ref, o_ref, *, native_ew):
    if native_ew:
        o_ref[...] = (x_ref[...] * scale_ref[...].astype(o_ref.dtype)
                      + shift_ref[...].astype(o_ref.dtype))
    else:
        o_ref[...] = (x_ref[...].astype(jnp.float32) * scale_ref[...]
                      + shift_ref[...]).astype(o_ref.dtype)


# --------------------------------- wrapper ----------------------------------

def batch_norm(x, gamma, *, eps=EPS, max_tile_bytes=None):
    """Training-mode BatchNorm1d normalization. x: (N, C); gamma: (C,)."""
    N, C = x.shape
    budget, vmem_limit = _vmem_budget_and_limit()
    if max_tile_bytes is not None:
        budget = max_tile_bytes

    native_ew = (x.dtype == jnp.bfloat16) and _bf16_native_ok()
    itemsize = jnp.dtype(x.dtype).itemsize
    # Per-element footprint of one grid step: double-buffered input + output
    # tiles plus f32 temporaries.
    bytes_per_elem = 4 * itemsize + 8

    # Pad channels to a lane multiple so output stores are lane-dense
    # (unmasked vst). Zero-padded channels are harmless and sliced off below.
    c_pad = max(_round_up(C, LANE), LANE)
    x_p = x if c_pad == C else jnp.pad(x, ((0, 0), (0, c_pad - C)))
    gamma_p = gamma.reshape(1, C).astype(jnp.float32)
    if c_pad != C:
        gamma_p = jnp.pad(gamma_p, ((0, 0), (0, c_pad - C)))

    inv_n = 1.0 / N

    def _cparams(sem):
        return pltpu.CompilerParams(dimension_semantics=sem,
                                    vmem_limit_bytes=vmem_limit)

    if N * LANE * bytes_per_elem <= budget:
        # ---- small/medium N: whole batch resident per channel tile ---------
        cap_elems = budget // (N * bytes_per_elem)
        # Keep >= 4 grid steps along C when C allows (double-buffering plus
        # the 2-TensorCore split on v7x).
        steps = min(4, c_pad // LANE)
        cap_elems = min(cap_elems, max(LANE, _round_down(c_pad // steps, LANE)))
        tc = _largest_dividing_tile(c_pad, LANE, cap_elems)

        out = pl.pallas_call(
            functools.partial(_bn_kernel, inv_n=inv_n, eps=eps,
                              native_ew=native_ew),
            out_shape=jax.ShapeDtypeStruct((N, c_pad), x.dtype),
            grid=(c_pad // tc,),
            in_specs=[
                pl.BlockSpec((N, tc), lambda j: (0, j)),
                pl.BlockSpec((1, tc), lambda j: (0, j)),
            ],
            out_specs=pl.BlockSpec((N, tc), lambda j: (0, j)),
            compiler_params=_cparams(("parallel",)),
        )(x_p, gamma_p)
        return out[:, :C] if c_pad != C else out

    # ---- large N: tile the batch axis too (two-call, two-pass) -------------
    tc = LANE
    tn = _round_down(min(max(budget // (tc * bytes_per_elem), SUBLANE), N),
                     SUBLANE)
    tn = max(tn, SUBLANE)
    n_pad = _round_up(N, tn)
    if n_pad != N:
        # Zero rows add nothing to sum / sum-sq; the true N lives in inv_n.
        x_p = jnp.pad(x_p, ((0, n_pad - N), (0, 0)))

    nc, ni = c_pad // tc, n_pad // tn

    scale, shift = pl.pallas_call(
        functools.partial(_bn_stats_kernel, inv_n=inv_n, eps=eps),
        out_shape=(jax.ShapeDtypeStruct((1, c_pad), jnp.float32),
                   jax.ShapeDtypeStruct((1, c_pad), jnp.float32)),
        grid=(nc, ni),
        in_specs=[
            pl.BlockSpec((tn, tc), lambda j, i: (i, j)),
            pl.BlockSpec((1, tc), lambda j, i: (0, j)),
        ],
        out_specs=(pl.BlockSpec((1, tc), lambda j, i: (0, j)),
                   pl.BlockSpec((1, tc), lambda j, i: (0, j))),
        scratch_shapes=[pltpu.VMEM((1, tc), jnp.float32),
                        pltpu.VMEM((1, tc), jnp.float32)],
        compiler_params=_cparams(("parallel", "arbitrary")),
    )(x_p, gamma_p)

    out = pl.pallas_call(
        functools.partial(_bn_apply_kernel, native_ew=native_ew),
        out_shape=jax.ShapeDtypeStruct((n_pad, c_pad), x.dtype),
        grid=(nc, ni),
        in_specs=[
            pl.BlockSpec((tn, tc), lambda j, i: (i, j)),
            pl.BlockSpec((1, tc), lambda j, i: (0, j)),
            pl.BlockSpec((1, tc), lambda j, i: (0, j)),
        ],
        out_specs=pl.BlockSpec((tn, tc), lambda j, i: (i, j)),
        compiler_params=_cparams(("parallel", "parallel")),
    )(x_p, scale, shift)

    return out[:N, :C]


def _reference_bn(x, gamma, eps=EPS):
    x32 = x.astype(jnp.float32)
    mean = jnp.mean(x32, axis=0, keepdims=True)
    var = jnp.mean((x32 - mean) ** 2, axis=0, keepdims=True)
    y = (x32 - mean) * lax.rsqrt(var + eps) * gamma.reshape(1, -1)
    return y.astype(x.dtype)


if __name__ == "__main__":
    # BNNeck BatchNorm1d on (batch, hidden): small demo shape.
    N, C = 8, 32
    key = jax.random.PRNGKey(0)
    x = jax.random.normal(key, (N, C), dtype=jnp.float32) * 2.0 + 0.5
    gamma = jnp.ones((C,), dtype=jnp.float32)   # kaiming init: weight = 1.0
    # beta (bias) is frozen at 0.0 by the module and folded out of the kernel.

    out = batch_norm(x, gamma)
    jax.block_until_ready(out)
    ref = _reference_bn(x, gamma)
    assert out.shape == x.shape and out.dtype == x.dtype
    assert jnp.allclose(out, ref, atol=1e-4, rtol=1e-4), "mismatch (small-N path)"

    # Also exercise the large-N (batch-tiled, two-pass) fallback by forcing a
    # tiny tile budget; results must match the same reference.
    N2, C2 = 64, 32
    x2 = jax.random.normal(jax.random.PRNGKey(1), (N2, C2),
                           dtype=jnp.float32) * 3.0 - 1.0
    g2 = jnp.ones((C2,), dtype=jnp.float32)
    out2 = batch_norm(x2, g2, max_tile_bytes=64 * 1024)
    jax.block_until_ready(out2)
    assert jnp.allclose(out2, _reference_bn(x2, g2), atol=1e-4, rtol=1e-4), \
        "mismatch (large-N path)"

    print("KERNEL_OK")
</pallas_src>

<mosaic_0001>
module attributes {stable_mosaic.version = 11 : i64} {
  func.func @_bn_kernel(%arg0: i32, %arg1: memref<8x128xf32, #tpu.memory_space<vmem>>, %arg2: memref<1x128xf32, #tpu.memory_space<vmem>>, %arg3: memref<8x128xf32, #tpu.memory_space<vmem>>) attributes {dimension_semantics = [#tpu.dimension_semantics<parallel>], iteration_bounds = array<i64: 1>, scalar_prefetch = 0 : i64, scratch_operands = 0 : i64, tpu.core_type = #tpu.core_type<tc>, window_params = [{transform_indices = @transform_0, window_bounds = array<i64: 8, 128>}, {transform_indices = @transform_1, window_bounds = array<i64: 1, 128>}, {transform_indices = @transform_2, window_bounds = array<i64: 8, 128>}]} {
    %c0 = arith.constant 0 : index
    %c0_0 = arith.constant 0 : index
    %0 = vector.load %arg1[%c0, %c0_0] : memref<8x128xf32, #tpu.memory_space<vmem>>, vector<8x128xf32>
    %cst = arith.constant dense<0.000000e+00> : vector<128xf32>
    %1 = vector.multi_reduction <add>, %0, %cst [0] : vector<8x128xf32> to vector<128xf32>
    %2 = vector.shape_cast %1 : vector<128xf32> to vector<1x128xf32>
    %cst_1 = arith.constant 1.250000e-01 : f32
    %3 = vector.broadcast %cst_1 : f32 to vector<1x128xf32>
    %4 = arith.mulf %2, %3 : vector<1x128xf32>
    %c0_2 = arith.constant 0 : index
    %c0_3 = arith.constant 0 : index
    %5 = vector.load %arg1[%c0_2, %c0_3] : memref<8x128xf32, #tpu.memory_space<vmem>>, vector<8x128xf32>
    %6 = vector.broadcast %4 : vector<1x128xf32> to vector<8x128xf32>
    %7 = arith.subf %5, %6 : vector<8x128xf32>
    %8 = arith.mulf %7, %7 : vector<8x128xf32>
    %cst_4 = arith.constant dense<0.000000e+00> : vector<128xf32>
    %9 = vector.multi_reduction <add>, %8, %cst_4 [0] : vector<8x128xf32> to vector<128xf32>
    %10 = vector.shape_cast %9 : vector<128xf32> to vector<1x128xf32>
    %cst_5 = arith.constant 1.250000e-01 : f32
    %11 = vector.broadcast %cst_5 : f32 to vector<1x128xf32>
    %12 = arith.mulf %10, %11 : vector<1x128xf32>
    %cst_6 = arith.constant 9.99999974E-6 : f32
    %13 = vector.broadcast %cst_6 : f32 to vector<1x128xf32>
    %14 = arith.addf %12, %13 : vector<1x128xf32>
    %15 = math.rsqrt %14 : vector<1x128xf32>
    %c0_7 = arith.constant 0 : index
    %c0_8 = arith.constant 0 : index
    %16 = vector.load %arg2[%c0_7, %c0_8] : memref<1x128xf32, #tpu.memory_space<vmem>>, vector<1x128xf32>
    %17 = arith.mulf %15, %16 : vector<1x128xf32>
    %cst_9 = arith.constant 0.000000e+00 : f32
    %18 = vector.broadcast %cst_9 : f32 to vector<1x128xf32>
    %19 = arith.subf %18, %4 : vector<1x128xf32>
    %20 = arith.mulf %19, %17 : vector<1x128xf32>
    %c0_10 = arith.constant 0 : index
    %c0_11 = arith.constant 0 : index
    %21 = vector.load %arg1[%c0_10, %c0_11] : memref<8x128xf32, #tpu.memory_space<vmem>>, vector<8x128xf32>
    %22 = vector.broadcast %17 : vector<1x128xf32> to vector<8x128xf32>
    %23 = arith.mulf %21, %22 : vector<8x128xf32>
    %24 = vector.broadcast %20 : vector<1x128xf32> to vector<8x128xf32>
    %25 = arith.addf %23, %24 : vector<8x128xf32>
    %c0_12 = arith.constant 0 : index
    %c0_13 = arith.constant 0 : index
    %26 = vector.load %arg3[%c0_12, %c0_13] : memref<8x128xf32, #tpu.memory_space<vmem>>, vector<8x128xf32>
    tpu.vector_store %arg3[%c0_12, %c0_13], %25 {strides = array<i32>} : memref<8x128xf32, #tpu.memory_space<vmem>>, vector<8x128xf32>,
    return
  }
  func.func @transform_0(%arg0: i32) -> (i32, i32) {
    %c0_i32 = arith.constant 0 : i32
    %c0_i32_0 = arith.constant 0 : i32
    return %c0_i32, %arg0 : i32, i32
  }
  func.func @transform_1(%arg0: i32) -> (i32, i32) {
    %c0_i32 = arith.constant 0 : i32
    %c0_i32_0 = arith.constant 0 : i32
    return %c0_i32, %arg0 : i32, i32
  }
  func.func @transform_2(%arg0: i32) -> (i32, i32) {
    %c0_i32 = arith.constant 0 : i32
    %c0_i32_0 = arith.constant 0 : i32
    return %c0_i32, %arg0 : i32, i32
  }
}

</mosaic_0001>

<llo_original>
// kernel: tpu_custom_call.1
$region0: #{tpu_custom_call.1}
  #allocation0 [shape = 'u32[]', space=smem, size = 0x4, offset = 0x4, fixed_abs, tag = 'smem constant byte address 0x4 - core index']
  #allocation1 [shape = 'u32[144,128]{1,0:T(1,128)}', space=vmem, size = 0x12000, scoped, tag = 'internal scratch']
  %s0 = inlined_call_operand.hbm [shape: f32[8,128], index: 0, kind: input, shape index: {}]
  %s1 = inlined_call_operand.vmem [shape: f32[1,128], index: 1, kind: input, shape index: {}]
  %s2 = inlined_call_operand.hbm [shape: f32[8,128], index: 2, kind: output, shape index: {}]
  %s3 = sld [smem:[#allocation0]]
  $region22: #{tpu_custom_call.1} parent=0
    _
  %s5 = ssub.s32 1, %s3
  %s6 = scalar_select 0, %s5, %s3
  $region1: #{tpu_custom_call.1} parent=0
    #allocation2 [shape = 'u8[4096]{0}', space=vmem, size = 0x1000, scoped, tag = 'input window, operand 0, single buffered']
    #allocation3 [shape = 's32[1]{0}', space=sflag, size = 0x4, scoped, tag = 'scoped memory for tpu_custom_call.1']
    #allocation4 [shape = 's32[1]{0}', space=sflag, size = 0x4, scoped, tag = 'scoped memory for tpu_custom_call.1']
    #allocation5 [shape = 'u8[4096]{0}', space=vmem, size = 0x1000, scoped, tag = 'output window, operand 0, single buffered']
    %7 = vsyncpa [#allocation3], 0
    %8 = vsyncpa [#allocation4], 0
    // Predicated region
    $region2: #{tpu_custom_call.1} parent=1 // pred_check
      _
    $region3: #{tpu_custom_call.1} parent=1 // pred_check_branch
      %10 = sbr.rel (0) target = $region5
    $region4: #{tpu_custom_call.1} parent=1 // pred_region
      %s12 = ssub.s32 128, 128
      %13 = vsyncadd [#allocation3], %s12
      %s15 = sshll.u32 [#allocation2], 4
      %s16 = int_to_ptr.vmem [resolvable:$true] %s15
      %18 = dma.hbm_to_vmem [thread:$0]  %s0, 128, %s16, [#allocation3]
    $region5: #{tpu_custom_call.1} parent=1 // pred_fallthru
      _
    // Predicated region
    $region6: #{tpu_custom_call.1} parent=1 // pred_check
      _
    $region7: #{tpu_custom_call.1} parent=1 // pred_check_branch
      %20 = sbr.rel (0) target = $region9
    $region8: #{tpu_custom_call.1} parent=1 // pred_region
      _
    $region9: #{tpu_custom_call.1} parent=1 // pred_fallthru
      _
    // Predicated region
    $region10: #{tpu_custom_call.1} parent=1 // pred_check
      _
    $region11: #{tpu_custom_call.1} parent=1 // pred_check_branch
      %22 = sbr.rel (0) target = $region13
    $region12: #{tpu_custom_call.1} parent=1 // pred_region
      %23 = dma.done [#allocation3], 128
    $region13: #{tpu_custom_call.1} parent=1 // pred_fallthru
      _
    %v24 = vld [vmem:[#allocation2] sm:$0xff]
    %v25 = vrot.slane %v24, 4
    %v26 = vadd.f32 %v24, %v25
    %v27 = vrot.slane %v26, 2
    %v28 = vadd.f32 %v26, %v27
    %v29 = vrot.slane %v28, 1
    %v30 = vadd.f32 %v28, %v29
    %v31 = vmul.f32 %v30, 0.125
    %v32 = vsub.f32 %v24, %v31
    %v33 = vmul.f32 %v32, %v32
    %v34 = vrot.slane %v33, 4
    %v35 = vadd.f32 %v33, %v34
    %v36 = vrot.slane %v35, 2
    %v37 = vadd.f32 %v35, %v36
    %v38 = vrot.slane %v37, 1
    %v39 = vadd.f32 %v37, %v38
    %v40 = vmul.f32 %v39, 0.125
    %v41 = vadd.f32 %v40, 1e-05
    %v42 = vrsqrt.pop %v41
    %v43 = vld [vmem:[%s1] sm:$0x1]
    %v44 = vmul.f32 %v42, %v43
    %v45 = vsub.f32 0.0, %v31
    %v46 = vmul.f32 %v45, %v44
    %v47 = vlaneseq
    %v48 = vshrl.u32 %v47, 7
    %v49 = vsub.s32 0, %v48
    %v50 = vrot.slane %v44, %v49
    %v51 = vmul.f32 %v24, %v50
    %v52 = vlaneseq
    %v53 = vshrl.u32 %v52, 7
    %v54 = vsub.s32 0, %v53
    %v55 = vrot.slane %v46, %v54
    %v56 = vadd.f32 %v51, %v55
    %57 = vst [vmem:[#allocation5] sm:$0xff] %v56
    // Predicated region
    $region14: #{tpu_custom_call.1} parent=1 // pred_check
      _
    $region15: #{tpu_custom_call.1} parent=1 // pred_check_branch
      %59 = sbr.rel (0) target = $region17
    $region16: #{tpu_custom_call.1} parent=1 // pred_region
      %s61 = ssub.s32 128, 128
      %62 = vsyncadd [#allocation4], %s61
      %s64 = sshll.u32 [#allocation5], 4
      %s65 = int_to_ptr.vmem [resolvable:$true] %s64
      %67 = dma.vmem_to_hbm [thread:$0]  %s65, 128, %s2, [#allocation4]
    $region17: #{tpu_custom_call.1} parent=1 // pred_fallthru
      _
    // Predicated region
    $region18: #{tpu_custom_call.1} parent=1 // pred_check
      _
    $region19: #{tpu_custom_call.1} parent=1 // pred_check_branch
      %69 = sbr.rel (0) target = $region21
    $region20: #{tpu_custom_call.1} parent=1 // pred_region
      %70 = dma.done [#allocation4], 128
    $region21: #{tpu_custom_call.1} parent=1 // pred_fallthru
      _
    %71 = vsyncpa [#allocation3], 1
    %72 = vsyncpa [#allocation4], 1

</llo_original>
